<compile_context>
chip_gen: v7x
topology: tpu7x:2x2x1
jax: 0.10.0
libtpu: 0.0.40
codegen_flags: <defaults>
</compile_context>

<pallas_src>
import functools

import jax
import jax.numpy as jnp
from jax import lax
from jax.experimental import pallas as pl
from jax.experimental.pallas import tpu as pltpu


def _layernorm_kernel(x_ref, g_ref, b_ref, o_ref, *, eps, n_valid):
    # x_ref: (tm, n_cols) tile (n_cols is the lane-padded feature dim);
    # g_ref/b_ref: (1, n_cols) per-neuron scale/bias; n_valid = true n_neurons.
    n_cols = x_ref.shape[1]
    inv_n = 1.0 / n_valid

    # Pass 1: row mean, accumulated in f32 (zero-padded lanes drop out of the sum
    # because inv_n uses the true neuron count).
    mu = jnp.sum(x_ref[...].astype(jnp.float32), axis=1, keepdims=True) * inv_n

    # Pass 2: variance (unbiased=False).  (x - mu) is recomputed from the resident
    # tile inside this expression; it is not kept for the output pass.
    xc = x_ref[...].astype(jnp.float32) - mu
    sq = xc * xc
    if n_cols != n_valid:
        # Padded lanes contribute (0 - mu)^2 and must be masked out of the variance.
        lane = lax.broadcasted_iota(jnp.int32, sq.shape, 1)
        sq = jnp.where(lane < n_valid, sq, 0.0)
    var = jnp.sum(sq, axis=1, keepdims=True) * inv_n
    inv_std = lax.rsqrt(var + eps)  # EUP slot, essentially free

    # Output pass: recompute (x - mu) from the input tile and fuse the whole
    # elementwise chain into the (lane-dense) store — no stored hat intermediate.
    out = (x_ref[...].astype(jnp.float32) - mu) * inv_std
    out = out * g_ref[...].astype(jnp.float32) + b_ref[...].astype(jnp.float32)
    o_ref[...] = out.astype(o_ref.dtype)


def _tpu_vmem_bytes():
    try:
        return int(pltpu.get_tpu_info().vmem_capacity_bytes)
    except Exception:
        return 128 * 1024 * 1024  # v5e/v6e default; conservative fallback


def _pick_tile_rows(n_batch, n_cols, dtype, *, max_tile_bytes, target_steps):
    """Largest aligned row tile that fits the per-tile budget, with >= target_steps
    grid steps when the batch is large enough (pipeline overlap / megacore split)."""
    itemsize = jnp.dtype(dtype).itemsize
    row_align = 16 if itemsize == 2 else 8  # bf16 packs 2 rows per sublane
    if n_batch <= row_align:
        return n_batch  # full-dim block is always legal

    tm = (max_tile_bytes // max(n_cols * itemsize, 1)) // row_align * row_align
    tm = max(tm, row_align)

    batch_rounded = -(-n_batch // row_align) * row_align
    tm = min(tm, batch_rounded)

    if n_batch > row_align * target_steps:
        tm_split = -(-n_batch // target_steps)            # ceil(n_batch / steps)
        tm_split = -(-tm_split // row_align) * row_align  # round up to alignment
        tm = min(tm, tm_split)

    return max(tm, row_align)


def custom_layer_norm(x, gamma, beta, eps=1e-5):
    """Pallas forward pass of CustomLayerNormManualModule.

    Args:
      x:     (n_batch, n_neurons)
      gamma: (n_neurons, 1)  -- same shape as the PyTorch parameter
      beta:  (n_neurons, 1)
    Returns:
      (n_batch, n_neurons) layer-normalized output (same dtype as x).
    """
    n_batch, n_neurons = x.shape
    assert gamma.shape == (n_neurons, 1)
    assert beta.shape == (n_neurons, 1)

    # Present gamma/beta as (1, n_neurons) rows (matches gamma.T / beta.T).
    g_row = gamma.reshape(1, n_neurons)
    b_row = beta.reshape(1, n_neurons)

    # Lane-pad the feature dim to a multiple of 128 → unmasked lane-dense stores.
    n_cols = -(-n_neurons // 128) * 128
    pad = n_cols - n_neurons
    if pad:
        x_in = jnp.pad(x, ((0, 0), (0, pad)))
        g_row = jnp.pad(g_row, ((0, 0), (0, pad)))
        b_row = jnp.pad(b_row, ((0, 0), (0, pad)))
    else:
        x_in = x

    # Generation-aware budgets: v7x has 64 MiB VMEM per TC and 2 TCs; v5e/v6e have
    # 128 MiB and a single TC.
    vmem_bytes = _tpu_vmem_bytes()
    small_vmem = vmem_bytes <= 96 * 1024 * 1024          # v7x-class part
    max_tile_bytes = (1 if small_vmem else 2) * 1024 * 1024
    target_steps = 8 if small_vmem else 4
    vmem_limit = min(64 * 1024 * 1024, (vmem_bytes * 5) // 8)  # ~40 MiB on v7x

    tm = _pick_tile_rows(n_batch, n_cols, x.dtype,
                         max_tile_bytes=max_tile_bytes, target_steps=target_steps)
    grid = (pl.cdiv(n_batch, tm),)

    kernel = functools.partial(_layernorm_kernel, eps=float(eps), n_valid=n_neurons)

    out = pl.pallas_call(
        kernel,
        out_shape=jax.ShapeDtypeStruct((n_batch, n_cols), x.dtype),
        grid_spec=pltpu.PrefetchScalarGridSpec(
            num_scalar_prefetch=0,
            grid=grid,
            in_specs=[
                pl.BlockSpec((tm, n_cols), lambda i: (i, 0)),
                pl.BlockSpec((1, n_cols), lambda i: (0, 0)),  # constant block: not re-fetched
                pl.BlockSpec((1, n_cols), lambda i: (0, 0)),
            ],
            out_specs=pl.BlockSpec((tm, n_cols), lambda i: (i, 0)),
        ),
        compiler_params=pltpu.CompilerParams(
            dimension_semantics=("parallel",),
            vmem_limit_bytes=vmem_limit,
        ),
    )(x_in, g_row, b_row)

    if pad:
        out = out[:, :n_neurons]
    return out
    # TODO(synk): optional — route the row-sum reductions through the MXU (ones-vector
    # matmul) if a v7x bundle dump ever shows the XLU as the binding slot.


def _reference_layer_norm(x, gamma, beta, eps=1e-5):
    # Pure-JAX reference mirroring the PyTorch forward exactly.
    x32 = x.astype(jnp.float32)
    mu = jnp.mean(x32, axis=1, keepdims=True)
    var = jnp.mean((x32 - mu) ** 2, axis=1, keepdims=True)  # unbiased=False
    hat = (x32 - mu) / jnp.sqrt(var + eps)
    out = hat * gamma.astype(jnp.float32).T + beta.astype(jnp.float32).T
    return out.astype(x.dtype)


if __name__ == "__main__":
    key = jax.random.PRNGKey(0)

    # Small shape consistent with the module's (n_batch, n_neurons) input.
    n_batch, n_neurons = 8, 32
    x = jax.random.normal(key, (n_batch, n_neurons), dtype=jnp.float32)
    gamma = jnp.ones((n_neurons, 1), dtype=jnp.float32)   # matches module __init__
    beta = jnp.zeros((n_neurons, 1), dtype=jnp.float32)

    out = jax.block_until_ready(custom_layer_norm(x, gamma, beta, eps=1e-5))
    ref = _reference_layer_norm(x, gamma, beta, eps=1e-5)
    assert out.shape == (n_batch, n_neurons)
    assert jnp.allclose(out, ref, atol=1e-5, rtol=1e-5), "mismatch vs reference (small)"

    # Larger case: exercises the multi-step grid / lane-aligned tiling path.
    n_batch2, n_neurons2 = 256, 512
    x2 = jax.random.normal(jax.random.PRNGKey(1), (n_batch2, n_neurons2),
                           dtype=jnp.float32) * 3.0 + 1.5
    gamma2 = jax.random.normal(jax.random.PRNGKey(2), (n_neurons2, 1), dtype=jnp.float32)
    beta2 = jax.random.normal(jax.random.PRNGKey(3), (n_neurons2, 1), dtype=jnp.float32)

    out2 = jax.block_until_ready(custom_layer_norm(x2, gamma2, beta2, eps=1e-5))
    ref2 = _reference_layer_norm(x2, gamma2, beta2, eps=1e-5)
    assert jnp.allclose(out2, ref2, atol=1e-4, rtol=1e-4), "mismatch vs reference (tiled)"

    # Non-multiple-of-128 feature dim with a ragged last row block.
    n_batch3, n_neurons3 = 100, 200
    x3 = jax.random.normal(jax.random.PRNGKey(4), (n_batch3, n_neurons3), dtype=jnp.float32)
    gamma3 = jax.random.normal(jax.random.PRNGKey(5), (n_neurons3, 1), dtype=jnp.float32)
    beta3 = jax.random.normal(jax.random.PRNGKey(6), (n_neurons3, 1), dtype=jnp.float32)

    out3 = jax.block_until_ready(custom_layer_norm(x3, gamma3, beta3, eps=1e-5))
    ref3 = _reference_layer_norm(x3, gamma3, beta3, eps=1e-5)
    assert jnp.allclose(out3, ref3, atol=1e-4, rtol=1e-4), "mismatch vs reference (padded)"

    print("KERNEL_OK")
</pallas_src>

<mosaic_0001>
module attributes {stable_mosaic.version = 11 : i64} {
  func.func @_layernorm_kernel(%arg0: i32, %arg1: memref<8x128xf32, #tpu.memory_space<vmem>>, %arg2: memref<1x128xf32, #tpu.memory_space<vmem>>, %arg3: memref<1x128xf32, #tpu.memory_space<vmem>>, %arg4: memref<8x128xf32, #tpu.memory_space<vmem>>) attributes {dimension_semantics = [#tpu.dimension_semantics<parallel>], iteration_bounds = array<i64: 1>, scalar_prefetch = 0 : i64, scratch_operands = 0 : i64, tpu.core_type = #tpu.core_type<tc>, window_params = [{transform_indices = @transform_0, window_bounds = array<i64: 8, 128>}, {pipeline_mode = #tpu.pipeline_mode<synchronous>, transform_indices = @transform_1, window_bounds = array<i64: 1, 128>}, {pipeline_mode = #tpu.pipeline_mode<synchronous>, transform_indices = @transform_2, window_bounds = array<i64: 1, 128>}, {transform_indices = @transform_3, window_bounds = array<i64: 8, 128>}]} {
    %c0 = arith.constant 0 : index
    %c0_0 = arith.constant 0 : index
    %0 = vector.load %arg1[%c0, %c0_0] : memref<8x128xf32, #tpu.memory_space<vmem>>, vector<8x128xf32>
    %cst = arith.constant dense<0.000000e+00> : vector<8xf32>
    %1 = vector.multi_reduction <add>, %0, %cst [1] : vector<8x128xf32> to vector<8xf32>
    %2 = vector.shape_cast %1 : vector<8xf32> to vector<8x1xf32>
    %cst_1 = arith.constant 3.125000e-02 : f32
    %3 = vector.broadcast %cst_1 : f32 to vector<8x1xf32>
    %4 = arith.mulf %2, %3 : vector<8x1xf32>
    %c0_2 = arith.constant 0 : index
    %c0_3 = arith.constant 0 : index
    %5 = vector.load %arg1[%c0_2, %c0_3] : memref<8x128xf32, #tpu.memory_space<vmem>>, vector<8x128xf32>
    %6 = vector.broadcast %4 : vector<8x1xf32> to vector<8x128xf32>
    %7 = arith.subf %5, %6 : vector<8x128xf32>
    %8 = arith.mulf %7, %7 : vector<8x128xf32>
    %9 = tpu.iota {dimensions = array<i32: 1>} : vector<8x128xi32>
    %c32_i32 = arith.constant 32 : i32
    %10 = vector.broadcast %c32_i32 : i32 to vector<8x128xi32>
    %11 = arith.cmpi slt, %9, %10 : vector<8x128xi32>
    %cst_4 = arith.constant 0.000000e+00 : f32
    %12 = vector.broadcast %cst_4 : f32 to vector<8x128xf32>
    %13 = arith.select %11, %8, %12 : vector<8x128xi1>, vector<8x128xf32>
    %cst_5 = arith.constant dense<0.000000e+00> : vector<8xf32>
    %14 = vector.multi_reduction <add>, %13, %cst_5 [1] : vector<8x128xf32> to vector<8xf32>
    %15 = vector.shape_cast %14 : vector<8xf32> to vector<8x1xf32>
    %cst_6 = arith.constant 3.125000e-02 : f32
    %16 = vector.broadcast %cst_6 : f32 to vector<8x1xf32>
    %17 = arith.mulf %15, %16 : vector<8x1xf32>
    %cst_7 = arith.constant 9.99999974E-6 : f32
    %18 = vector.broadcast %cst_7 : f32 to vector<8x1xf32>
    %19 = arith.addf %17, %18 : vector<8x1xf32>
    %20 = math.rsqrt %19 : vector<8x1xf32>
    %c0_8 = arith.constant 0 : index
    %c0_9 = arith.constant 0 : index
    %21 = vector.load %arg1[%c0_8, %c0_9] : memref<8x128xf32, #tpu.memory_space<vmem>>, vector<8x128xf32>
    %22 = vector.broadcast %4 : vector<8x1xf32> to vector<8x128xf32>
    %23 = arith.subf %21, %22 : vector<8x128xf32>
    %24 = vector.broadcast %20 : vector<8x1xf32> to vector<8x128xf32>
    %25 = arith.mulf %23, %24 : vector<8x128xf32>
    %c0_10 = arith.constant 0 : index
    %c0_11 = arith.constant 0 : index
    %26 = vector.load %arg2[%c0_10, %c0_11] : memref<1x128xf32, #tpu.memory_space<vmem>>, vector<1x128xf32>
    %27 = vector.broadcast %26 : vector<1x128xf32> to vector<8x128xf32>
    %28 = arith.mulf %25, %27 : vector<8x128xf32>
    %c0_12 = arith.constant 0 : index
    %c0_13 = arith.constant 0 : index
    %29 = vector.load %arg3[%c0_12, %c0_13] : memref<1x128xf32, #tpu.memory_space<vmem>>, vector<1x128xf32>
    %30 = vector.broadcast %29 : vector<1x128xf32> to vector<8x128xf32>
    %31 = arith.addf %28, %30 : vector<8x128xf32>
    %c0_14 = arith.constant 0 : index
    %c0_15 = arith.constant 0 : index
    %32 = vector.load %arg4[%c0_14, %c0_15] : memref<8x128xf32, #tpu.memory_space<vmem>>, vector<8x128xf32>
    tpu.vector_store %arg4[%c0_14, %c0_15], %31 {strides = array<i32>} : memref<8x128xf32, #tpu.memory_space<vmem>>, vector<8x128xf32>,
    return
  }
  func.func @transform_0(%arg0: i32) -> (i32, i32) {
    %c0_i32 = arith.constant 0 : i32
    %c0_i32_0 = arith.constant 0 : i32
    return %arg0, %c0_i32 : i32, i32
  }
  func.func @transform_1(%arg0: i32) -> (i32, i32) {
    %c0_i32 = arith.constant 0 : i32
    %c0_i32_0 = arith.constant 0 : i32
    %c0_i32_1 = arith.constant 0 : i32
    return %c0_i32, %c0_i32_0 : i32, i32
  }
  func.func @transform_2(%arg0: i32) -> (i32, i32) {
    %c0_i32 = arith.constant 0 : i32
    %c0_i32_0 = arith.constant 0 : i32
    %c0_i32_1 = arith.constant 0 : i32
    return %c0_i32, %c0_i32_0 : i32, i32
  }
  func.func @transform_3(%arg0: i32) -> (i32, i32) {
    %c0_i32 = arith.constant 0 : i32
    %c0_i32_0 = arith.constant 0 : i32
    return %arg0, %c0_i32 : i32, i32
  }
}

</mosaic_0001>

<llo_original>
// kernel: tpu_custom_call.1
$region0: #{tpu_custom_call.1}
  #allocation0 [shape = 'u32[]', space=smem, size = 0x4, offset = 0x4, fixed_abs, tag = 'smem constant byte address 0x4 - core index']
  #allocation1 [shape = 'u32[144,128]{1,0:T(1,128)}', space=vmem, size = 0x12000, scoped, tag = 'internal scratch']
  %s0 = inlined_call_operand.hbm [shape: f32[8,128], index: 0, kind: input, shape index: {}]
  %s1 = inlined_call_operand.hbm [shape: f32[1,128], index: 1, kind: input, shape index: {}]
  %s2 = inlined_call_operand.hbm [shape: f32[1,128], index: 2, kind: input, shape index: {}]
  %s3 = inlined_call_operand.hbm [shape: f32[8,128], index: 3, kind: output, shape index: {}]
  %s4 = sld [smem:[#allocation0]]
  $region34: #{tpu_custom_call.1} parent=0
    _
  %s6 = ssub.s32 1, %s4
  %s7 = scalar_select 0, %s6, %s4
  $region1: #{tpu_custom_call.1} parent=0
    #allocation2 [shape = 'u8[4096]{0}', space=vmem, size = 0x1000, scoped, tag = 'input window, operand 0, single buffered']
    #allocation3 [shape = 's32[1]{0}', space=sflag, size = 0x4, scoped, tag = 'scoped memory for tpu_custom_call.1']
    #allocation4 [shape = 's32[1]{0}', space=sflag, size = 0x4, scoped, tag = 'scoped memory for tpu_custom_call.1']
    #allocation5 [shape = 'u8[512]{0}', space=vmem, size = 0x400, scoped, tag = 'input window, operand 1, single buffered']
    #allocation6 [shape = 's32[1]{0}', space=sflag, size = 0x4, scoped, tag = 'scoped memory for tpu_custom_call.1']
    #allocation7 [shape = 'u8[512]{0}', space=vmem, size = 0x400, scoped, tag = 'input window, operand 2, single buffered']
    #allocation8 [shape = 'u8[4096]{0}', space=vmem, size = 0x1000, scoped, tag = 'output window, operand 0, single buffered']
    %8 = vsyncpa [#allocation3], 0
    %9 = vsyncpa [#allocation6], 0
    %10 = vsyncpa [#allocation4], 0
    // Predicated region
    $region2: #{tpu_custom_call.1} parent=1 // pred_check
      _
    $region3: #{tpu_custom_call.1} parent=1 // pred_check_branch
      %12 = sbr.rel (0) target = $region5
    $region4: #{tpu_custom_call.1} parent=1 // pred_region
      %s14 = ssub.s32 128, 128
      %15 = vsyncadd [#allocation3], %s14
      %s17 = sshll.u32 [#allocation2], 4
      %s18 = int_to_ptr.vmem [resolvable:$true] %s17
      %20 = dma.hbm_to_vmem [thread:$0]  %s0, 128, %s18, [#allocation3]
    $region5: #{tpu_custom_call.1} parent=1 // pred_fallthru
      _
    // Predicated region
    $region6: #{tpu_custom_call.1} parent=1 // pred_check
      _
    $region7: #{tpu_custom_call.1} parent=1 // pred_check_branch
      %22 = sbr.rel (0) target = $region9
    $region8: #{tpu_custom_call.1} parent=1 // pred_region
      %s24 = ssub.s32 16, 16
      %25 = vsyncadd [#allocation6], %s24
      %s27 = sshll.u32 [#allocation5], 4
      %s28 = int_to_ptr.vmem [resolvable:$true] %s27
      %30 = dma.hbm_to_vmem [thread:$0]  %s1, 16, %s28, [#allocation6]
    $region9: #{tpu_custom_call.1} parent=1 // pred_fallthru
      _
    // Predicated region
    $region10: #{tpu_custom_call.1} parent=1 // pred_check
      _
    $region11: #{tpu_custom_call.1} parent=1 // pred_check_branch
      %32 = sbr.rel (0) target = $region13
    $region12: #{tpu_custom_call.1} parent=1 // pred_region
      %s34 = ssub.s32 16, 16
      %35 = vsyncadd [#allocation6], %s34
      %s37 = sshll.u32 [#allocation7], 4
      %s38 = int_to_ptr.vmem [resolvable:$true] %s37
      %40 = dma.hbm_to_vmem [thread:$0]  %s2, 16, %s38, [#allocation6]
    $region13: #{tpu_custom_call.1} parent=1 // pred_fallthru
      _
    // Predicated region
    $region14: #{tpu_custom_call.1} parent=1 // pred_check
      _
    $region15: #{tpu_custom_call.1} parent=1 // pred_check_branch
      %42 = sbr.rel (0) target = $region17
    $region16: #{tpu_custom_call.1} parent=1 // pred_region
      %43 = dma.done [#allocation3], 128
    $region17: #{tpu_custom_call.1} parent=1 // pred_fallthru
      _
    // Predicated region
    $region18: #{tpu_custom_call.1} parent=1 // pred_check
      _
    $region19: #{tpu_custom_call.1} parent=1 // pred_check_branch
      %45 = sbr.rel (0) target = $region21
    $region20: #{tpu_custom_call.1} parent=1 // pred_region
      %46 = dma.done [#allocation6], 16
    $region21: #{tpu_custom_call.1} parent=1 // pred_fallthru
      _
    // Predicated region
    $region22: #{tpu_custom_call.1} parent=1 // pred_check
      _
    $region23: #{tpu_custom_call.1} parent=1 // pred_check_branch
      %48 = sbr.rel (0) target = $region25
    $region24: #{tpu_custom_call.1} parent=1 // pred_region
      %49 = dma.done [#allocation6], 16
    $region25: #{tpu_custom_call.1} parent=1 // pred_fallthru
      _
    %v50 = vld [vmem:[#allocation2] sm:$0xff]
    %51 = vadd.xlane.f32.xlu0 %v50
    %v52 = vpop.xlane.xlu0 %51
    %v53 = vmul.f32 %v52, 0.03125
    %v54 = vsub.f32 %v50, %v53
    %v55 = vmul.f32 %v54, %v54
    %v56 = vlaneseq
    %v57 = vand.u32 %v56, 127
    %vm58 = vcmp.lt.s32.totalorder %v57, 32
    %v59 = vsel %vm58, %v55, 0.0
    %60 = vadd.xlane.f32.xlu0 %v59
    %v61 = vpop.xlane.xlu0 %60
    %v62 = vmul.f32 %v61, 0.03125
    %v63 = vadd.f32 %v62, 1e-05
    %v64 = vrsqrt.pop %v63
    %v65 = vmul.f32 %v54, %v64
    %v66 = vld [vmem:[#allocation5] sm:$0x1]
    %v68 = vlaneseq
    %v69 = vshrl.u32 %v68, 7
    %v70 = vsub.s32 0, %v69
    %v71 = vrot.slane %v66, %v70
    %v73 = vmul.f32 %v65, %v71
    %v74 = vld [vmem:[#allocation7] sm:$0x1]
    %v76 = vlaneseq
    %v77 = vshrl.u32 %v76, 7
    %v78 = vsub.s32 0, %v77
    %v79 = vrot.slane %v74, %v78
    %v81 = vadd.f32 %v73, %v79
    %82 = vst [vmem:[#allocation8] sm:$0xff] %v81
    // Predicated region
    $region26: #{tpu_custom_call.1} parent=1 // pred_check
      _
    $region27: #{tpu_custom_call.1} parent=1 // pred_check_branch
      %84 = sbr.rel (0) target = $region29
    $region28: #{tpu_custom_call.1} parent=1 // pred_region
      %s86 = ssub.s32 128, 128
      %87 = vsyncadd [#allocation4], %s86
      %s89 = sshll.u32 [#allocation8], 4
      %s90 = int_to_ptr.vmem [resolvable:$true] %s89
      %92 = dma.vmem_to_hbm [thread:$0]  %s90, 128, %s3, [#allocation4]
    $region29: #{tpu_custom_call.1} parent=1 // pred_fallthru
      _
    // Predicated region
    $region30: #{tpu_custom_call.1} parent=1 // pred_check
      _
    $region31: #{tpu_custom_call.1} parent=1 // pred_check_branch
      %94 = sbr.rel (0) target = $region33
    $region32: #{tpu_custom_call.1} parent=1 // pred_region
      %95 = dma.done [#allocation4], 128
    $region33: #{tpu_custom_call.1} parent=1 // pred_fallthru
      _
    %96 = vsyncpa [#allocation3], 1
    %97 = vsyncpa [#allocation6], 1
    %98 = vsyncpa [#allocation4], 1

</llo_original>
